<compile_context>
chip_gen: v5e
topology: v5e:2x2
jax: 0.10.0
libtpu: 0.0.40
codegen_flags: <defaults>
</compile_context>

<pallas_src>
import functools

import numpy as np
import jax
import jax.numpy as jnp
from jax.experimental import pallas as pl
from jax.experimental.pallas import tpu as pltpu

LANE = 128  # TPU lane width; every feature dim is zero-padded to this.


def _vae_fused_kernel(x_ref, w_ref, b_ref, enc_ref, rec_ref, *,
                      e_layers, d_layers):
    """Fused VAE forward: encoder -> [mu|logvar] -> decoder, one kernel.

    x_ref  : (B, 128)         flattened + zero-padded input (cols [0:4*feat)).
    w_ref  : (n_w, 128, 128)  packed, zero-padded weight slab.
    b_ref  : (n_b, 128)       packed, zero-padded bias slab.
    enc_ref: (B, 128)         encoder head output; cols [0:2*latent) = mu|logvar.
    rec_ref: (B, 128)         reconstruction; cols [0:feat) meaningful.

    Zero-padding of the weights/biases makes the extra lanes mathematically
    inert, so no masking, slicing or concatenation is needed inside the body.
    """
    f32 = jnp.float32
    x = x_ref[...].astype(f32)

    def matmul(h, wi):
        return jnp.dot(h, w_ref[wi].astype(f32), preferred_element_type=f32)

    def bias(bi):
        return b_ref[bi:bi + 1, :].astype(f32)  # (1, 128) broadcasts over batch

    wi = 0
    bi = 0

    # ---- encoder: e_layers hidden ReLU layers + linear head -> [mu | logvar]
    h = x
    for _ in range(e_layers):
        h = jnp.maximum(matmul(h, wi) + bias(bi), 0.0)
        wi += 1
        bi += 1
    enc = matmul(h, wi) + bias(bi)
    wi += 1
    bi += 1
    enc_ref[...] = enc.astype(enc_ref.dtype)

    # ---- reparameterize (eval mode): latent_sample == mean.
    # Decoder layer 0: cat([z, target]) @ W0 is computed as
    #   enc @ Wz_pad + x @ Wt_pad
    # where Wz_pad is non-zero only at the mu rows (logvar columns of `enc`
    # hit zero rows) and Wt_pad is non-zero only at the channel-2 rows of the
    # flattened input.  No in-kernel concat.
    h = jnp.maximum(matmul(enc, wi) + matmul(x, wi + 1) + bias(bi), 0.0)
    wi += 2
    bi += 1
    for _ in range(d_layers - 1):
        h = jnp.maximum(matmul(h, wi) + bias(bi), 0.0)
        wi += 1
        bi += 1
    rec = matmul(h, wi) + bias(bi)
    rec_ref[...] = rec.astype(rec_ref.dtype)


def vae_forward(x, params):
    """x: (B, n_chan, spec_dim+cos_dim) float32.  Eval-mode forward pass."""
    B, n_chan, feat = x.shape
    latent_dim = params["latent_dim"]
    e_layers = params["e_layers"]
    d_layers = params["d_layers"]

    # Single lane-dense slab: flatten channels, zero-pad features to 128 lanes.
    x_flat = x.reshape(B, n_chan * feat)
    x_pad = jnp.pad(x_flat, ((0, 0), (0, LANE - n_chan * feat)))

    kernel = functools.partial(_vae_fused_kernel,
                               e_layers=e_layers, d_layers=d_layers)

    enc_pad, rec_pad = pl.pallas_call(
        kernel,
        out_shape=(jax.ShapeDtypeStruct((B, LANE), jnp.float32),
                   jax.ShapeDtypeStruct((B, LANE), jnp.float32)),
        in_specs=[pl.BlockSpec(memory_space=pltpu.MemorySpace.VMEM)
                  for _ in range(3)],
        out_specs=(pl.BlockSpec(memory_space=pltpu.MemorySpace.VMEM),
                   pl.BlockSpec(memory_space=pltpu.MemorySpace.VMEM)),
    )(x_pad, params["w_slab"], params["b_slab"])

    mean = enc_pad[:, :latent_dim]
    logvar = enc_pad[:, latent_dim:2 * latent_dim]
    latent_sample = mean                      # eval-mode reparameterize
    reconstruct = rec_pad[:, :feat]
    return reconstruct, (mean, logvar), latent_sample


# ----------------------------------------------------------------------------
# parameter construction / packing
# ----------------------------------------------------------------------------

def _init_linear(key, d_in, d_out):
    """Deterministic Kaiming-style init (mimics weights_init)."""
    kw, _ = jax.random.split(key)
    scale = np.float32(np.sqrt(2.0 / d_in))
    w = np.asarray(jax.random.normal(kw, (d_in, d_out), dtype=jnp.float32)) * scale
    b = np.zeros((d_out,), dtype=np.float32)
    return w.astype(np.float32), b


def build_vae_params(key, spec_dim, latent_dim, e_layers, d_layers, cos_dim,
                     hidden_dim=32, n_chan=4):
    assert e_layers >= 1 and d_layers >= 1
    feat = spec_dim + cos_dim
    enc_in = 2 * feat
    dec_out = feat
    assert n_chan * feat <= LANE and hidden_dim <= LANE
    assert 2 * latent_dim <= LANE and latent_dim + feat <= LANE

    n_lin = (e_layers + 1) + (d_layers + 1)
    keys = jax.random.split(key, n_lin)
    ki = iter(keys)

    # ---- unpadded per-layer params (kept for the pure-numpy reference path)
    enc_layers = []
    d = enc_in
    for _ in range(e_layers):
        enc_layers.append(_init_linear(next(ki), d, hidden_dim))
        d = hidden_dim
    enc_layers.append(_init_linear(next(ki), d, 2 * latent_dim))  # head: [mu|logvar]

    dec_layers = []
    d = latent_dim + feat
    for _ in range(d_layers):
        dec_layers.append(_init_linear(next(ki), d, hidden_dim))
        d = hidden_dim
    dec_layers.append(_init_linear(next(ki), d, dec_out))

    # ---- pack into two contiguous, lane-dense, zero-padded slabs
    n_w = (e_layers + 1) + (d_layers + 1) + 1  # +1: decoder layer 0 split in two
    n_b = (e_layers + 1) + (d_layers + 1)
    w_slab = np.zeros((n_w, LANE, LANE), dtype=np.float32)
    b_slab = np.zeros((n_b, LANE), dtype=np.float32)

    wi = bi = 0
    for w, b in enc_layers:
        w_slab[wi, :w.shape[0], :w.shape[1]] = w
        b_slab[bi, :b.shape[0]] = b
        wi += 1
        bi += 1

    # decoder layer 0: cat([z, target]) @ W0  ->  z @ Wz_pad + x @ Wt_pad
    w0, b0 = dec_layers[0]
    w_slab[wi, :latent_dim, :w0.shape[1]] = w0[:latent_dim]          # latent rows
    wi += 1
    w_slab[wi, 2 * feat:3 * feat, :w0.shape[1]] = w0[latent_dim:]    # channel-2 rows
    wi += 1
    b_slab[bi, :b0.shape[0]] = b0
    bi += 1

    for w, b in dec_layers[1:]:
        w_slab[wi, :w.shape[0], :w.shape[1]] = w
        b_slab[bi, :b.shape[0]] = b
        wi += 1
        bi += 1
    assert wi == n_w and bi == n_b

    return {
        "latent_dim": latent_dim, "e_layers": e_layers, "d_layers": d_layers,
        "w_slab": jnp.asarray(w_slab), "b_slab": jnp.asarray(b_slab),
        "enc_layers": enc_layers, "dec_layers": dec_layers,
    }


def vae_forward_ref(x, params):
    """Pure-numpy reference of the stand-in architecture (eval mode)."""
    x = np.asarray(x, dtype=np.float32)
    B = x.shape[0]
    latent_dim = params["latent_dim"]
    input_data = x[:, :2, :].reshape(B, -1)
    target_data = x[:, 2, :].reshape(B, -1)

    h = input_data
    for w, b in params["enc_layers"][:-1]:
        h = np.maximum(h @ w + b, 0.0)
    w, b = params["enc_layers"][-1]
    enc = h @ w + b
    mean, logvar = enc[:, :latent_dim], enc[:, latent_dim:]
    z = mean                                          # eval-mode reparameterize

    h = np.concatenate([z, target_data], axis=1)
    for w, b in params["dec_layers"][:-1]:
        h = np.maximum(h @ w + b, 0.0)
    w, b = params["dec_layers"][-1]
    recon = h @ w + b
    return recon, (mean, logvar), z


if __name__ == "__main__":
    spec_dim = 16
    cos_dim = 4
    latent_dim = 8
    e_layers, d_layers = 3, 3
    batch = 2
    n_chan = 4
    feat = spec_dim + cos_dim

    root = jax.random.PRNGKey(0)
    k_params, k_x = jax.random.split(root)

    params = build_vae_params(k_params, spec_dim, latent_dim, e_layers, d_layers,
                              cos_dim, hidden_dim=32, n_chan=n_chan)

    x = jax.random.normal(k_x, (batch, n_chan, feat), dtype=jnp.float32)

    fwd = jax.jit(lambda xx: vae_forward(xx, params))
    recon, (mean, logvar), z = fwd(x)
    jax.block_until_ready((recon, mean, logvar, z))

    assert recon.shape == (batch, feat)
    assert mean.shape == (batch, latent_dim)
    assert logvar.shape == (batch, latent_dim)
    assert z.shape == (batch, latent_dim)

    # correctness check against a pure-numpy reference (tolerance covers MXU
    # f32 accumulation-order / multi-pass differences)
    r_ref, (m_ref, lv_ref), z_ref = vae_forward_ref(x, params)
    np.testing.assert_allclose(np.asarray(recon), r_ref, rtol=2e-2, atol=2e-2)
    np.testing.assert_allclose(np.asarray(mean), m_ref, rtol=2e-2, atol=2e-2)
    np.testing.assert_allclose(np.asarray(logvar), lv_ref, rtol=2e-2, atol=2e-2)
    np.testing.assert_allclose(np.asarray(z), z_ref, rtol=2e-2, atol=2e-2)

    print("KERNEL_OK")
</pallas_src>

<mosaic_0001>
module attributes {stable_mosaic.version = 11 : i64} {
  func.func @_vae_fused_kernel(%arg0: memref<2x128xf32, #tpu.memory_space<vmem>>, %arg1: memref<9x128x128xf32, #tpu.memory_space<vmem>>, %arg2: memref<8x128xf32, #tpu.memory_space<vmem>>, %arg3: memref<2x128xf32, #tpu.memory_space<vmem>>, %arg4: memref<2x128xf32, #tpu.memory_space<vmem>>) attributes {dimension_semantics = [], scalar_prefetch = 0 : i64, scratch_operands = 0 : i64, tpu.core_type = #tpu.core_type<tc>} {
    %c0 = arith.constant 0 : index
    %c0_0 = arith.constant 0 : index
    %0 = vector.load %arg0[%c0, %c0_0] : memref<2x128xf32, #tpu.memory_space<vmem>>, vector<2x128xf32>
    %c0_1 = arith.constant 0 : index
    %c0_2 = arith.constant 0 : index
    %c0_3 = arith.constant 0 : index
    %1 = vector.load %arg1[%c0_1, %c0_2, %c0_3] : memref<9x128x128xf32, #tpu.memory_space<vmem>>, vector<1x128x128xf32>
    %2 = vector.shape_cast %1 : vector<1x128x128xf32> to vector<128x128xf32>
    %cst = arith.constant dense<0.000000e+00> : vector<2x128xf32>
    %3 = tpu.matmul %0, %2, %cst {dimension_numbers = #tpu.dot_dimension_numbers<[1], [0], [0], [1], [0, 0, 1, 1], [], []>} : vector<2x128xf32>, vector<128x128xf32>, vector<2x128xf32> -> vector<2x128xf32>
    %c0_4 = arith.constant 0 : index
    %c0_5 = arith.constant 0 : index
    %4 = vector.load %arg2[%c0_4, %c0_5] : memref<8x128xf32, #tpu.memory_space<vmem>>, vector<1x128xf32>
    %5 = vector.broadcast %4 : vector<1x128xf32> to vector<2x128xf32>
    %6 = arith.addf %3, %5 : vector<2x128xf32>
    %cst_6 = arith.constant 0.000000e+00 : f32
    %7 = vector.broadcast %cst_6 : f32 to vector<2x128xf32>
    %8 = arith.maximumf %6, %7 : vector<2x128xf32>
    %c1 = arith.constant 1 : index
    %c0_7 = arith.constant 0 : index
    %c0_8 = arith.constant 0 : index
    %9 = vector.load %arg1[%c1, %c0_7, %c0_8] : memref<9x128x128xf32, #tpu.memory_space<vmem>>, vector<1x128x128xf32>
    %10 = vector.shape_cast %9 : vector<1x128x128xf32> to vector<128x128xf32>
    %cst_9 = arith.constant dense<0.000000e+00> : vector<2x128xf32>
    %11 = tpu.matmul %8, %10, %cst_9 {dimension_numbers = #tpu.dot_dimension_numbers<[1], [0], [0], [1], [0, 0, 1, 1], [], []>} : vector<2x128xf32>, vector<128x128xf32>, vector<2x128xf32> -> vector<2x128xf32>
    %c1_10 = arith.constant 1 : index
    %c0_11 = arith.constant 0 : index
    %12 = vector.load %arg2[%c1_10, %c0_11] : memref<8x128xf32, #tpu.memory_space<vmem>>, vector<1x128xf32>
    %13 = vector.broadcast %12 : vector<1x128xf32> to vector<2x128xf32>
    %14 = arith.addf %11, %13 : vector<2x128xf32>
    %cst_12 = arith.constant 0.000000e+00 : f32
    %15 = vector.broadcast %cst_12 : f32 to vector<2x128xf32>
    %16 = arith.maximumf %14, %15 : vector<2x128xf32>
    %c2 = arith.constant 2 : index
    %c0_13 = arith.constant 0 : index
    %c0_14 = arith.constant 0 : index
    %17 = vector.load %arg1[%c2, %c0_13, %c0_14] : memref<9x128x128xf32, #tpu.memory_space<vmem>>, vector<1x128x128xf32>
    %18 = vector.shape_cast %17 : vector<1x128x128xf32> to vector<128x128xf32>
    %cst_15 = arith.constant dense<0.000000e+00> : vector<2x128xf32>
    %19 = tpu.matmul %16, %18, %cst_15 {dimension_numbers = #tpu.dot_dimension_numbers<[1], [0], [0], [1], [0, 0, 1, 1], [], []>} : vector<2x128xf32>, vector<128x128xf32>, vector<2x128xf32> -> vector<2x128xf32>
    %c2_16 = arith.constant 2 : index
    %c0_17 = arith.constant 0 : index
    %20 = vector.load %arg2[%c2_16, %c0_17] : memref<8x128xf32, #tpu.memory_space<vmem>>, vector<1x128xf32>
    %21 = vector.broadcast %20 : vector<1x128xf32> to vector<2x128xf32>
    %22 = arith.addf %19, %21 : vector<2x128xf32>
    %cst_18 = arith.constant 0.000000e+00 : f32
    %23 = vector.broadcast %cst_18 : f32 to vector<2x128xf32>
    %24 = arith.maximumf %22, %23 : vector<2x128xf32>
    %c3 = arith.constant 3 : index
    %c0_19 = arith.constant 0 : index
    %c0_20 = arith.constant 0 : index
    %25 = vector.load %arg1[%c3, %c0_19, %c0_20] : memref<9x128x128xf32, #tpu.memory_space<vmem>>, vector<1x128x128xf32>
    %26 = vector.shape_cast %25 : vector<1x128x128xf32> to vector<128x128xf32>
    %cst_21 = arith.constant dense<0.000000e+00> : vector<2x128xf32>
    %27 = tpu.matmul %24, %26, %cst_21 {dimension_numbers = #tpu.dot_dimension_numbers<[1], [0], [0], [1], [0, 0, 1, 1], [], []>} : vector<2x128xf32>, vector<128x128xf32>, vector<2x128xf32> -> vector<2x128xf32>
    %c3_22 = arith.constant 3 : index
    %c0_23 = arith.constant 0 : index
    %28 = vector.load %arg2[%c3_22, %c0_23] : memref<8x128xf32, #tpu.memory_space<vmem>>, vector<1x128xf32>
    %29 = vector.broadcast %28 : vector<1x128xf32> to vector<2x128xf32>
    %30 = arith.addf %27, %29 : vector<2x128xf32>
    %c0_24 = arith.constant 0 : index
    %c0_25 = arith.constant 0 : index
    %31 = vector.load %arg3[%c0_24, %c0_25] : memref<2x128xf32, #tpu.memory_space<vmem>>, vector<2x128xf32>
    tpu.vector_store %arg3[%c0_24, %c0_25], %30 {strides = array<i32>} : memref<2x128xf32, #tpu.memory_space<vmem>>, vector<2x128xf32>,
    %c4 = arith.constant 4 : index
    %c0_26 = arith.constant 0 : index
    %c0_27 = arith.constant 0 : index
    %32 = vector.load %arg1[%c4, %c0_26, %c0_27] : memref<9x128x128xf32, #tpu.memory_space<vmem>>, vector<1x128x128xf32>
    %33 = vector.shape_cast %32 : vector<1x128x128xf32> to vector<128x128xf32>
    %cst_28 = arith.constant dense<0.000000e+00> : vector<2x128xf32>
    %34 = tpu.matmul %30, %33, %cst_28 {dimension_numbers = #tpu.dot_dimension_numbers<[1], [0], [0], [1], [0, 0, 1, 1], [], []>} : vector<2x128xf32>, vector<128x128xf32>, vector<2x128xf32> -> vector<2x128xf32>
    %c5 = arith.constant 5 : index
    %c0_29 = arith.constant 0 : index
    %c0_30 = arith.constant 0 : index
    %35 = vector.load %arg1[%c5, %c0_29, %c0_30] : memref<9x128x128xf32, #tpu.memory_space<vmem>>, vector<1x128x128xf32>
    %36 = vector.shape_cast %35 : vector<1x128x128xf32> to vector<128x128xf32>
    %cst_31 = arith.constant dense<0.000000e+00> : vector<2x128xf32>
    %37 = tpu.matmul %0, %36, %cst_31 {dimension_numbers = #tpu.dot_dimension_numbers<[1], [0], [0], [1], [0, 0, 1, 1], [], []>} : vector<2x128xf32>, vector<128x128xf32>, vector<2x128xf32> -> vector<2x128xf32>
    %38 = arith.addf %34, %37 : vector<2x128xf32>
    %c4_32 = arith.constant 4 : index
    %c0_33 = arith.constant 0 : index
    %39 = vector.load %arg2[%c4_32, %c0_33] : memref<8x128xf32, #tpu.memory_space<vmem>>, vector<1x128xf32>
    %40 = vector.broadcast %39 : vector<1x128xf32> to vector<2x128xf32>
    %41 = arith.addf %38, %40 : vector<2x128xf32>
    %cst_34 = arith.constant 0.000000e+00 : f32
    %42 = vector.broadcast %cst_34 : f32 to vector<2x128xf32>
    %43 = arith.maximumf %41, %42 : vector<2x128xf32>
    %c6 = arith.constant 6 : index
    %c0_35 = arith.constant 0 : index
    %c0_36 = arith.constant 0 : index
    %44 = vector.load %arg1[%c6, %c0_35, %c0_36] : memref<9x128x128xf32, #tpu.memory_space<vmem>>, vector<1x128x128xf32>
    %45 = vector.shape_cast %44 : vector<1x128x128xf32> to vector<128x128xf32>
    %cst_37 = arith.constant dense<0.000000e+00> : vector<2x128xf32>
    %46 = tpu.matmul %43, %45, %cst_37 {dimension_numbers = #tpu.dot_dimension_numbers<[1], [0], [0], [1], [0, 0, 1, 1], [], []>} : vector<2x128xf32>, vector<128x128xf32>, vector<2x128xf32> -> vector<2x128xf32>
    %c5_38 = arith.constant 5 : index
    %c0_39 = arith.constant 0 : index
    %47 = vector.load %arg2[%c5_38, %c0_39] : memref<8x128xf32, #tpu.memory_space<vmem>>, vector<1x128xf32>
    %48 = vector.broadcast %47 : vector<1x128xf32> to vector<2x128xf32>
    %49 = arith.addf %46, %48 : vector<2x128xf32>
    %cst_40 = arith.constant 0.000000e+00 : f32
    %50 = vector.broadcast %cst_40 : f32 to vector<2x128xf32>
    %51 = arith.maximumf %49, %50 : vector<2x128xf32>
    %c7 = arith.constant 7 : index
    %c0_41 = arith.constant 0 : index
    %c0_42 = arith.constant 0 : index
    %52 = vector.load %arg1[%c7, %c0_41, %c0_42] : memref<9x128x128xf32, #tpu.memory_space<vmem>>, vector<1x128x128xf32>
    %53 = vector.shape_cast %52 : vector<1x128x128xf32> to vector<128x128xf32>
    %cst_43 = arith.constant dense<0.000000e+00> : vector<2x128xf32>
    %54 = tpu.matmul %51, %53, %cst_43 {dimension_numbers = #tpu.dot_dimension_numbers<[1], [0], [0], [1], [0, 0, 1, 1], [], []>} : vector<2x128xf32>, vector<128x128xf32>, vector<2x128xf32> -> vector<2x128xf32>
    %c6_44 = arith.constant 6 : index
    %c0_45 = arith.constant 0 : index
    %55 = vector.load %arg2[%c6_44, %c0_45] : memref<8x128xf32, #tpu.memory_space<vmem>>, vector<1x128xf32>
    %56 = vector.broadcast %55 : vector<1x128xf32> to vector<2x128xf32>
    %57 = arith.addf %54, %56 : vector<2x128xf32>
    %cst_46 = arith.constant 0.000000e+00 : f32
    %58 = vector.broadcast %cst_46 : f32 to vector<2x128xf32>
    %59 = arith.maximumf %57, %58 : vector<2x128xf32>
    %c8 = arith.constant 8 : index
    %c0_47 = arith.constant 0 : index
    %c0_48 = arith.constant 0 : index
    %60 = vector.load %arg1[%c8, %c0_47, %c0_48] : memref<9x128x128xf32, #tpu.memory_space<vmem>>, vector<1x128x128xf32>
    %61 = vector.shape_cast %60 : vector<1x128x128xf32> to vector<128x128xf32>
    %cst_49 = arith.constant dense<0.000000e+00> : vector<2x128xf32>
    %62 = tpu.matmul %59, %61, %cst_49 {dimension_numbers = #tpu.dot_dimension_numbers<[1], [0], [0], [1], [0, 0, 1, 1], [], []>} : vector<2x128xf32>, vector<128x128xf32>, vector<2x128xf32> -> vector<2x128xf32>
    %c7_50 = arith.constant 7 : index
    %c0_51 = arith.constant 0 : index
    %63 = vector.load %arg2[%c7_50, %c0_51] : memref<8x128xf32, #tpu.memory_space<vmem>>, vector<1x128xf32>
    %64 = vector.broadcast %63 : vector<1x128xf32> to vector<2x128xf32>
    %65 = arith.addf %62, %64 : vector<2x128xf32>
    %c0_52 = arith.constant 0 : index
    %c0_53 = arith.constant 0 : index
    %66 = vector.load %arg4[%c0_52, %c0_53] : memref<2x128xf32, #tpu.memory_space<vmem>>, vector<2x128xf32>
    tpu.vector_store %arg4[%c0_52, %c0_53], %65 {strides = array<i32>} : memref<2x128xf32, #tpu.memory_space<vmem>>, vector<2x128xf32>,
    return
  }
}

</mosaic_0001>

<llo_original>
// kernel: _lambda_.1
$region0: #{_lambda_.1}
  #allocation0 [shape = 'u32[]', space=smem, size = 0x4, offset = 0x4, fixed_abs, tag = 'smem constant byte address 0x4 - core index']
  #allocation1 [shape = 'u32[72,128]{1,0:T(1,128)}', space=vmem, size = 0x9000, scoped, tag = 'internal scratch']
  %s0 = inlined_call_operand.vmem [shape: f32[2,128], index: 0, kind: input, shape index: {}]
  %s1 = inlined_call_operand.hbm [shape: f32[9,128,128], index: 1, kind: input, shape index: {}]
  %s2 = inlined_call_operand.vmem [shape: f32[8,128], index: 2, kind: input, shape index: {}]
  %s3 = inlined_call_operand.vmem [shape: f32[2,128], index: 3, kind: output, shape index: {0}]
  %s4 = inlined_call_operand.hbm [shape: f32[2,128], index: 4, kind: output, shape index: {1}]
  %5 = xla_tuple %s3, %s4
  %s6 = sld [smem:[#allocation0]]
  $region34: #{_lambda_.1} parent=0
    _
  %s8 = ssub.s32 1, %s6
  %s9 = scalar_select 0, %s8, %s6
  $region1: #{_lambda_.1} parent=0
    #allocation2 [shape = 'u8[589824]{0}', space=vmem, size = 0x90000, scoped, tag = 'input window, operand 1, single buffered']
    #allocation3 [shape = 's32[1]{0}', space=sflag, size = 0x4, scoped, tag = 'scoped memory for _lambda_.1']
    #allocation4 [shape = 's32[1]{0}', space=sflag, size = 0x4, scoped, tag = 'scoped memory for _lambda_.1']
    #allocation5 [shape = 'u8[1024]{0}', space=vmem, size = 0x400, scoped, tag = 'output window, operand 1, single buffered']
    %10 = vsyncpa [#allocation3], 0
    %11 = vsyncpa [#allocation4], 0
    // Predicated region
    $region2: #{_lambda_.1} parent=1 // pred_check
      _
    $region3: #{_lambda_.1} parent=1 // pred_check_branch
      %13 = sbr.rel (0) target = $region5
    $region4: #{_lambda_.1} parent=1 // pred_region
      _
    $region5: #{_lambda_.1} parent=1 // pred_fallthru
      _
    // Predicated region
    $region6: #{_lambda_.1} parent=1 // pred_check
      _
    $region7: #{_lambda_.1} parent=1 // pred_check_branch
      %15 = sbr.rel (0) target = $region9
    $region8: #{_lambda_.1} parent=1 // pred_region
      %17 = vsyncadd [#allocation3], 0
      %s18 = sshll.u32 %s1, 4
      %s19 = int_to_ptr.hbm [resolvable:$true] %s18
      %s20 = sshll.u32 [#allocation2], 4
      %s21 = int_to_ptr.vmem [resolvable:$true] %s20
      %26 = dma.hbm_to_vmem [thread:$0]  %s19, 18432, %s21, [#allocation3], 128, 128, 8
    $region9: #{_lambda_.1} parent=1 // pred_fallthru
      _
    // Predicated region
    $region10: #{_lambda_.1} parent=1 // pred_check
      _
    $region11: #{_lambda_.1} parent=1 // pred_check_branch
      %28 = sbr.rel (0) target = $region13
    $region12: #{_lambda_.1} parent=1 // pred_region
      _
    $region13: #{_lambda_.1} parent=1 // pred_fallthru
      _
    // Predicated region
    $region14: #{_lambda_.1} parent=1 // pred_check
      _
    $region15: #{_lambda_.1} parent=1 // pred_check_branch
      %30 = sbr.rel (0) target = $region17
    $region16: #{_lambda_.1} parent=1 // pred_region
      %32 = dma.done [#allocation3], 18432
    $region17: #{_lambda_.1} parent=1 // pred_fallthru
      _
    %v33 = vld [vmem:[%s0] sm:$0x3]
    %v34 = vld [vmem:[#allocation2] sm:$0xff]
    %v35 = vld [vmem:[#allocation2 + $0x8] sm:$0xff]
    %v36 = vld [vmem:[#allocation2 + $0x10] sm:$0xff]
    %v37 = vld [vmem:[#allocation2 + $0x18] sm:$0xff]
    %v38 = vld [vmem:[#allocation2 + $0x20] sm:$0xff]
    %v39 = vld [vmem:[#allocation2 + $0x28] sm:$0xff]
    %v40 = vld [vmem:[#allocation2 + $0x30] sm:$0xff]
    %v41 = vld [vmem:[#allocation2 + $0x38] sm:$0xff]
    %v42 = vld [vmem:[#allocation2 + $0x40] sm:$0xff]
    %v43 = vld [vmem:[#allocation2 + $0x48] sm:$0xff]
    %v44 = vld [vmem:[#allocation2 + $0x50] sm:$0xff]
    %v45 = vld [vmem:[#allocation2 + $0x58] sm:$0xff]
    %v46 = vld [vmem:[#allocation2 + $0x60] sm:$0xff]
    %v47 = vld [vmem:[#allocation2 + $0x68] sm:$0xff]
    %v48 = vld [vmem:[#allocation2 + $0x70] sm:$0xff]
    %v49 = vld [vmem:[#allocation2 + $0x78] sm:$0xff]
    %v50 = vld [vmem:[%s2] sm:$0x1]
    %v51 = vperm.slane %v50, 0
    %52 = vmatpush.msra.mxu0 %v49
    %53 = vmatpush.msra.mxu0 %v48
    %54 = vmatpush.msra.mxu0 %v47
    %55 = vmatpush.msra.mxu0 %v46
    %56 = vmatpush.msra.mxu0 %v45
    %57 = vmatpush.msra.mxu0 %v44
    %58 = vmatpush.msra.mxu0 %v43
    %59 = vmatpush.msra.mxu0 %v42
    %60 = vmatpush.msra.mxu0 %v41
    %61 = vmatpush.msra.mxu0 %v40
    %62 = vmatpush.msra.mxu0 %v39
    %63 = vmatpush.msra.mxu0 %v38
    %64 = vmatpush.msra.mxu0 %v37
    %65 = vmatpush.msra.mxu0 %v36
    %66 = vmatpush.msra.mxu0 %v35
    %67 = vmatpush.msra.mxu0 %v34
    %68 = vmatmul.f32.gmra.mxu0 %v33
    %v69 = vpop.f32.mrf.mxu0
    %v70 = vadd.f32 %v51, %v69
    %71 = vdwg.mxu0
    %v72 = vmax.f32 %v70, 0.0
    %s73 = scalar_lea.vmem [#allocation2], 128
    %v74 = vld [vmem:[%s73] sm:$0xff]
    %v75 = vld [vmem:[%s73 + $0x8] sm:$0xff]
    %v76 = vld [vmem:[%s73 + $0x10] sm:$0xff]
    %v77 = vld [vmem:[%s73 + $0x18] sm:$0xff]
    %v78 = vld [vmem:[%s73 + $0x20] sm:$0xff]
    %v79 = vld [vmem:[%s73 + $0x28] sm:$0xff]
    %v80 = vld [vmem:[%s73 + $0x30] sm:$0xff]
    %v81 = vld [vmem:[%s73 + $0x38] sm:$0xff]
    %v82 = vld [vmem:[%s73 + $0x40] sm:$0xff]
    %v83 = vld [vmem:[%s73 + $0x48] sm:$0xff]
    %v84 = vld [vmem:[%s73 + $0x50] sm:$0xff]
    %v85 = vld [vmem:[%s73 + $0x58] sm:$0xff]
    %v86 = vld [vmem:[%s73 + $0x60] sm:$0xff]
    %v87 = vld [vmem:[%s73 + $0x68] sm:$0xff]
    %v88 = vld [vmem:[%s73 + $0x70] sm:$0xff]
    %v89 = vld [vmem:[%s73 + $0x78] sm:$0xff]
    %v90 = vld [vmem:[%s2 + $0x1] sm:$0x1]
    %v91 = vperm.slane %v90, 0
    %92 = vmatpush.msra.mxu0 %v89
    %93 = vmatpush.msra.mxu0 %v88
    %94 = vmatpush.msra.mxu0 %v87
    %95 = vmatpush.msra.mxu0 %v86
    %96 = vmatpush.msra.mxu0 %v85
    %97 = vmatpush.msra.mxu0 %v84
    %98 = vmatpush.msra.mxu0 %v83
    %99 = vmatpush.msra.mxu0 %v82
    %100 = vmatpush.msra.mxu0 %v81
    %101 = vmatpush.msra.mxu0 %v80
    %102 = vmatpush.msra.mxu0 %v79
    %103 = vmatpush.msra.mxu0 %v78
    %104 = vmatpush.msra.mxu0 %v77
    %105 = vmatpush.msra.mxu0 %v76
    %106 = vmatpush.msra.mxu0 %v75
    %107 = vmatpush.msra.mxu0 %v74
    %108 = vmatmul.f32.gmra.mxu0 %v72
    %v109 = vpop.f32.mrf.mxu0
    %v110 = vadd.f32 %v91, %v109
    %111 = vdwg.mxu0
    %v112 = vmax.f32 %v110, 0.0
    %s113 = scalar_lea.vmem [#allocation2], 256
    %v114 = vld [vmem:[%s113] sm:$0xff]
    %v115 = vld [vmem:[%s113 + $0x8] sm:$0xff]
    %v116 = vld [vmem:[%s113 + $0x10] sm:$0xff]
    %v117 = vld [vmem:[%s113 + $0x18] sm:$0xff]
    %v118 = vld [vmem:[%s113 + $0x20] sm:$0xff]
    %v119 = vld [vmem:[%s113 + $0x28] sm:$0xff]
    %v120 = vld [vmem:[%s113 + $0x30] sm:$0xff]
    %v121 = vld [vmem:[%s113 + $0x38] sm:$0xff]
    %v122 = vld [vmem:[%s113 + $0x40] sm:$0xff]
    %v123 = vld [vmem:[%s113 + $0x48] sm:$0xff]
    %v124 = vld [vmem:[%s113 + $0x50] sm:$0xff]
    %v125 = vld [vmem:[%s113 + $0x58] sm:$0xff]
    %v126 = vld [vmem:[%s113 + $0x60] sm:$0xff]
    %v127 = vld [vmem:[%s113 + $0x68] sm:$0xff]
    %v128 = vld [vmem:[%s113 + $0x70] sm:$0xff]
    %v129 = vld [vmem:[%s113 + $0x78] sm:$0xff]
    %v130 = vld [vmem:[%s2 + $0x2] sm:$0x1]
    %v131 = vperm.slane %v130, 0
    %132 = vmatpush.msra.mxu0 %v129
    %133 = vmatpush.msra.mxu0 %v128
    %134 = vmatpush.msra.mxu0 %v127
    %135 = vmatpush.msra.mxu0 %v126
    %136 = vmatpush.msra.mxu0 %v125
    %137 = vmatpush.msra.mxu0 %v124
    %138 = vmatpush.msra.mxu0 %v123
    %139 = vmatpush.msra.mxu0 %v122
    %140 = vmatpush.msra.mxu0 %v121
    %141 = vmatpush.msra.mxu0 %v120
    %142 = vmatpush.msra.mxu0 %v119
    %143 = vmatpush.msra.mxu0 %v118
    %144 = vmatpush.msra.mxu0 %v117
    %145 = vmatpush.msra.mxu0 %v116
    %146 = vmatpush.msra.mxu0 %v115
    %147 = vmatpush.msra.mxu0 %v114
    %148 = vmatmul.f32.gmra.mxu0 %v112
    %v149 = vpop.f32.mrf.mxu0
    %v150 = vadd.f32 %v131, %v149
    %151 = vdwg.mxu0
    %v152 = vmax.f32 %v150, 0.0
    %s153 = scalar_lea.vmem [#allocation2], 384
    %v154 = vld [vmem:[%s153] sm:$0xff]
    %v155 = vld [vmem:[%s153 + $0x8] sm:$0xff]
    %v156 = vld [vmem:[%s153 + $0x10] sm:$0xff]
    %v157 = vld [vmem:[%s153 + $0x18] sm:$0xff]
    %v158 = vld [vmem:[%s153 + $0x20] sm:$0xff]
    %v159 = vld [vmem:[%s153 + $0x28] sm:$0xff]
    %v160 = vld [vmem:[%s153 + $0x30] sm:$0xff]
    %v161 = vld [vmem:[%s153 + $0x38] sm:$0xff]
    %v162 = vld [vmem:[%s153 + $0x40] sm:$0xff]
    %v163 = vld [vmem:[%s153 + $0x48] sm:$0xff]
    %v164 = vld [vmem:[%s153 + $0x50] sm:$0xff]
    %v165 = vld [vmem:[%s153 + $0x58] sm:$0xff]
    %v166 = vld [vmem:[%s153 + $0x60] sm:$0xff]
    %v167 = vld [vmem:[%s153 + $0x68] sm:$0xff]
    %v168 = vld [vmem:[%s153 + $0x70] sm:$0xff]
    %v169 = vld [vmem:[%s153 + $0x78] sm:$0xff]
    %v170 = vld [vmem:[%s2 + $0x3] sm:$0x1]
    %v171 = vperm.slane %v170, 0
    %172 = vmatpush.msra.mxu0 %v169
    %173 = vmatpush.msra.mxu0 %v168
    %174 = vmatpush.msra.mxu0 %v167
    %175 = vmatpush.msra.mxu0 %v166
    %176 = vmatpush.msra.mxu0 %v165
    %177 = vmatpush.msra.mxu0 %v164
    %178 = vmatpush.msra.mxu0 %v163
    %179 = vmatpush.msra.mxu0 %v162
    %180 = vmatpush.msra.mxu0 %v161
    %181 = vmatpush.msra.mxu0 %v160
    %182 = vmatpush.msra.mxu0 %v159
    %183 = vmatpush.msra.mxu0 %v158
    %184 = vmatpush.msra.mxu0 %v157
    %185 = vmatpush.msra.mxu0 %v156
    %186 = vmatpush.msra.mxu0 %v155
    %187 = vmatpush.msra.mxu0 %v154
    %188 = vmatmul.f32.gmra.mxu0 %v152
    %v189 = vpop.f32.mrf.mxu0
    %v190 = vadd.f32 %v171, %v189
    %191 = vdwg.mxu0
    %192 = vst [vmem:[%s3] sm:$0x3] %v190
    %s193 = scalar_lea.vmem [#allocation2], 512
    %v194 = vld [vmem:[%s193] sm:$0xff]
    %v195 = vld [vmem:[%s193 + $0x8] sm:$0xff]
    %v196 = vld [vmem:[%s193 + $0x10] sm:$0xff]
    %v197 = vld [vmem:[%s193 + $0x18] sm:$0xff]
    %v198 = vld [vmem:[%s193 + $0x20] sm:$0xff]
    %v199 = vld [vmem:[%s193 + $0x28] sm:$0xff]
    %v200 = vld [vmem:[%s193 + $0x30] sm:$0xff]
    %v201 = vld [vmem:[%s193 + $0x38] sm:$0xff]
    %v202 = vld [vmem:[%s193 + $0x40] sm:$0xff]
    %v203 = vld [vmem:[%s193 + $0x48] sm:$0xff]
    %v204 = vld [vmem:[%s193 + $0x50] sm:$0xff]
    %v205 = vld [vmem:[%s193 + $0x58] sm:$0xff]
    %v206 = vld [vmem:[%s193 + $0x60] sm:$0xff]
    %v207 = vld [vmem:[%s193 + $0x68] sm:$0xff]
    %v208 = vld [vmem:[%s193 + $0x70] sm:$0xff]
    %v209 = vld [vmem:[%s193 + $0x78] sm:$0xff]
    %s210 = scalar_lea.vmem [#allocation2], 640
    %v211 = vld [vmem:[%s210] sm:$0xff]
    %v212 = vld [vmem:[%s210 + $0x8] sm:$0xff]
    %v213 = vld [vmem:[%s210 + $0x10] sm:$0xff]
    %v214 = vld [vmem:[%s210 + $0x18] sm:$0xff]
    %v215 = vld [vmem:[%s210 + $0x20] sm:$0xff]
    %v216 = vld [vmem:[%s210 + $0x28] sm:$0xff]
    %v217 = vld [vmem:[%s210 + $0x30] sm:$0xff]
    %v218 = vld [vmem:[%s210 + $0x38] sm:$0xff]
    %v219 = vld [vmem:[%s210 + $0x40] sm:$0xff]
    %v220 = vld [vmem:[%s210 + $0x48] sm:$0xff]
    %v221 = vld [vmem:[%s210 + $0x50] sm:$0xff]
    %v222 = vld [vmem:[%s210 + $0x58] sm:$0xff]
    %v223 = vld [vmem:[%s210 + $0x60] sm:$0xff]
    %v224 = vld [vmem:[%s210 + $0x68] sm:$0xff]
    %v225 = vld [vmem:[%s210 + $0x70] sm:$0xff]
    %v226 = vld [vmem:[%s210 + $0x78] sm:$0xff]
    %227 = vmatpush.msra.mxu0 %v226
    %228 = vmatpush.msra.mxu0 %v225
    %229 = vmatpush.msra.mxu0 %v224
    %230 = vmatpush.msra.mxu0 %v223
    %231 = vmatpush.msra.mxu0 %v222
    %232 = vmatpush.msra.mxu0 %v221
    %233 = vmatpush.msra.mxu0 %v220
    %234 = vmatpush.msra.mxu0 %v219
    %235 = vmatpush.msra.mxu0 %v218
    %236 = vmatpush.msra.mxu0 %v217
    %237 = vmatpush.msra.mxu0 %v216
    %238 = vmatpush.msra.mxu0 %v215
    %239 = vmatpush.msra.mxu0 %v214
    %240 = vmatpush.msra.mxu0 %v213
    %241 = vmatpush.msra.mxu0 %v212
    %242 = vmatpush.msra.mxu0 %v211
    %243 = vmatmul.f32.gmra.mxu0 %v33
    %v244 = vpop.f32.mrf.mxu0
    %v245 = vadd.f32 0.0, %v244
    %246 = vdwg.mxu0
    %247 = vmatpush.msra.mxu0 %v209
    %248 = vmatpush.msra.mxu0 %v208
    %249 = vmatpush.msra.mxu0 %v207
    %250 = vmatpush.msra.mxu0 %v206
    %251 = vmatpush.msra.mxu0 %v205
    %252 = vmatpush.msra.mxu0 %v204
    %253 = vmatpush.msra.mxu0 %v203
    %254 = vmatpush.msra.mxu0 %v202
    %255 = vmatpush.msra.mxu0 %v201
    %256 = vmatpush.msra.mxu0 %v200
    %257 = vmatpush.msra.mxu0 %v199
    %258 = vmatpush.msra.mxu0 %v198
    %259 = vmatpush.msra.mxu0 %v197
    %260 = vmatpush.msra.mxu0 %v196
    %261 = vmatpush.msra.mxu0 %v195
    %262 = vmatpush.msra.mxu0 %v194
    %263 = vmatmul.f32.gmra.mxu0 %v190
    %v264 = vpop.f32.mrf.mxu0
    %v265 = vadd.f32 %v245, %v264
    %266 = vdwg.mxu0
    %v267 = vld [vmem:[%s2 + $0x4] sm:$0x1]
    %v268 = vperm.slane %v267, 0
    %v269 = vadd.f32 %v265, %v268
    %v270 = vmax.f32 %v269, 0.0
    %s271 = scalar_lea.vmem [#allocation2], 768
    %v272 = vld [vmem:[%s271] sm:$0xff]
    %v273 = vld [vmem:[%s271 + $0x8] sm:$0xff]
    %v274 = vld [vmem:[%s271 + $0x10] sm:$0xff]
    %v275 = vld [vmem:[%s271 + $0x18] sm:$0xff]
    %v276 = vld [vmem:[%s271 + $0x20] sm:$0xff]
    %v277 = vld [vmem:[%s271 + $0x28] sm:$0xff]
    %v278 = vld [vmem:[%s271 + $0x30] sm:$0xff]
    %v279 = vld [vmem:[%s271 + $0x38] sm:$0xff]
    %v280 = vld [vmem:[%s271 + $0x40] sm:$0xff]
    %v281 = vld [vmem:[%s271 + $0x48] sm:$0xff]
    %v282 = vld [vmem:[%s271 + $0x50] sm:$0xff]
    %v283 = vld [vmem:[%s271 + $0x58] sm:$0xff]
    %v284 = vld [vmem:[%s271 + $0x60] sm:$0xff]
    %v285 = vld [vmem:[%s271 + $0x68] sm:$0xff]
    %v286 = vld [vmem:[%s271 + $0x70] sm:$0xff]
    %v287 = vld [vmem:[%s271 + $0x78] sm:$0xff]
    %v288 = vld [vmem:[%s2 + $0x5] sm:$0x1]
    %v289 = vperm.slane %v288, 0
    %290 = vmatpush.msra.mxu0 %v287
    %291 = vmatpush.msra.mxu0 %v286
    %292 = vmatpush.msra.mxu0 %v285
    %293 = vmatpush.msra.mxu0 %v284
    %294 = vmatpush.msra.mxu0 %v283
    %295 = vmatpush.msra.mxu0 %v282
    %296 = vmatpush.msra.mxu0 %v281
    %297 = vmatpush.msra.mxu0 %v280
    %298 = vmatpush.msra.mxu0 %v279
    %299 = vmatpush.msra.mxu0 %v278
    %300 = vmatpush.msra.mxu0 %v277
    %301 = vmatpush.msra.mxu0 %v276
    %302 = vmatpush.msra.mxu0 %v275
    %303 = vmatpush.msra.mxu0 %v274
    %304 = vmatpush.msra.mxu0 %v273
    %305 = vmatpush.msra.mxu0 %v272
    %306 = vmatmul.f32.gmra.mxu0 %v270
    %v307 = vpop.f32.mrf.mxu0
    %v308 = vadd.f32 %v289, %v307
    %309 = vdwg.mxu0
    %v310 = vmax.f32 %v308, 0.0
    %s311 = scalar_lea.vmem [#allocation2], 896
    %v312 = vld [vmem:[%s311] sm:$0xff]
    %v313 = vld [vmem:[%s311 + $0x8] sm:$0xff]
    %v314 = vld [vmem:[%s311 + $0x10] sm:$0xff]
    %v315 = vld [vmem:[%s311 + $0x18] sm:$0xff]
    %v316 = vld [vmem:[%s311 + $0x20] sm:$0xff]
    %v317 = vld [vmem:[%s311 + $0x28] sm:$0xff]
    %v318 = vld [vmem:[%s311 + $0x30] sm:$0xff]
    %v319 = vld [vmem:[%s311 + $0x38] sm:$0xff]
    %v320 = vld [vmem:[%s311 + $0x40] sm:$0xff]
    %v321 = vld [vmem:[%s311 + $0x48] sm:$0xff]
    %v322 = vld [vmem:[%s311 + $0x50] sm:$0xff]
    %v323 = vld [vmem:[%s311 + $0x58] sm:$0xff]
    %v324 = vld [vmem:[%s311 + $0x60] sm:$0xff]
    %v325 = vld [vmem:[%s311 + $0x68] sm:$0xff]
    %v326 = vld [vmem:[%s311 + $0x70] sm:$0xff]
    %v327 = vld [vmem:[%s311 + $0x78] sm:$0xff]
    %v328 = vld [vmem:[%s2 + $0x6] sm:$0x1]
    %v329 = vperm.slane %v328, 0
    %330 = vmatpush.msra.mxu0 %v327
    %331 = vmatpush.msra.mxu0 %v326
    %332 = vmatpush.msra.mxu0 %v325
    %333 = vmatpush.msra.mxu0 %v324
    %334 = vmatpush.msra.mxu0 %v323
    %335 = vmatpush.msra.mxu0 %v322
    %336 = vmatpush.msra.mxu0 %v321
    %337 = vmatpush.msra.mxu0 %v320
    %338 = vmatpush.msra.mxu0 %v319
    %339 = vmatpush.msra.mxu0 %v318
    %340 = vmatpush.msra.mxu0 %v317
    %341 = vmatpush.msra.mxu0 %v316
    %342 = vmatpush.msra.mxu0 %v315
    %343 = vmatpush.msra.mxu0 %v314
    %344 = vmatpush.msra.mxu0 %v313
    %345 = vmatpush.msra.mxu0 %v312
    %346 = vmatmul.f32.gmra.mxu0 %v310
    %v347 = vpop.f32.mrf.mxu0
    %v348 = vadd.f32 %v329, %v347
    %349 = vdwg.mxu0
    %v350 = vmax.f32 %v348, 0.0
    %s351 = scalar_lea.vmem [#allocation2], 1024
    %v352 = vld [vmem:[%s351] sm:$0xff]
    %v353 = vld [vmem:[%s351 + $0x8] sm:$0xff]
    %v354 = vld [vmem:[%s351 + $0x10] sm:$0xff]
    %v355 = vld [vmem:[%s351 + $0x18] sm:$0xff]
    %v356 = vld [vmem:[%s351 + $0x20] sm:$0xff]
    %v357 = vld [vmem:[%s351 + $0x28] sm:$0xff]
    %v358 = vld [vmem:[%s351 + $0x30] sm:$0xff]
    %v359 = vld [vmem:[%s351 + $0x38] sm:$0xff]
    %v360 = vld [vmem:[%s351 + $0x40] sm:$0xff]
    %v361 = vld [vmem:[%s351 + $0x48] sm:$0xff]
    %v362 = vld [vmem:[%s351 + $0x50] sm:$0xff]
    %v363 = vld [vmem:[%s351 + $0x58] sm:$0xff]
    %v364 = vld [vmem:[%s351 + $0x60] sm:$0xff]
    %v365 = vld [vmem:[%s351 + $0x68] sm:$0xff]
    %v366 = vld [vmem:[%s351 + $0x70] sm:$0xff]
    %v367 = vld [vmem:[%s351 + $0x78] sm:$0xff]
    %v368 = vld [vmem:[%s2 + $0x7] sm:$0x1]
    %v369 = vperm.slane %v368, 0
    %370 = vmatpush.msra.mxu0 %v367
    %371 = vmatpush.msra.mxu0 %v366
    %372 = vmatpush.msra.mxu0 %v365
    %373 = vmatpush.msra.mxu0 %v364
    %374 = vmatpush.msra.mxu0 %v363
    %375 = vmatpush.msra.mxu0 %v362
    %376 = vmatpush.msra.mxu0 %v361
    %377 = vmatpush.msra.mxu0 %v360
    %378 = vmatpush.msra.mxu0 %v359
    %379 = vmatpush.msra.mxu0 %v358
    %380 = vmatpush.msra.mxu0 %v357
    %381 = vmatpush.msra.mxu0 %v356
    %382 = vmatpush.msra.mxu0 %v355
    %383 = vmatpush.msra.mxu0 %v354
    %384 = vmatpush.msra.mxu0 %v353
    %385 = vmatpush.msra.mxu0 %v352
    %386 = vmatmul.f32.gmra.mxu0 %v350
    %v387 = vpop.f32.mrf.mxu0
    %v388 = vadd.f32 %v369, %v387
    %389 = vdwg.mxu0
    %390 = vst [vmem:[#allocation5] sm:$0x3] %v388
    // Predicated region
    $region18: #{_lambda_.1} parent=1 // pred_check
      _
    $region19: #{_lambda_.1} parent=1 // pred_check_branch
      %392 = sbr.rel (0) target = $region21
    $region20: #{_lambda_.1} parent=1 // pred_region
      _
    $region21: #{_lambda_.1} parent=1 // pred_fallthru
      _
    // Predicated region
    $region22: #{_lambda_.1} parent=1 // pred_check
      _
    $region23: #{_lambda_.1} parent=1 // pred_check_branch
      %394 = sbr.rel (0) target = $region25
    $region24: #{_lambda_.1} parent=1 // pred_region
      %396 = vsyncadd [#allocation4], 0
      %s398 = sshll.u32 [#allocation5], 4
      %s399 = int_to_ptr.vmem [resolvable:$true] %s398
      %s400 = sshll.u32 %s4, 4
      %s401 = int_to_ptr.hbm [resolvable:$true] %s400
      %403 = dma.vmem_to_hbm [thread:$0]  %s399, 32, %s401, [#allocation4]
    $region25: #{_lambda_.1} parent=1 // pred_fallthru
      _
    // Predicated region
    $region26: #{_lambda_.1} parent=1 // pred_check
      _
    $region27: #{_lambda_.1} parent=1 // pred_check_branch
      %405 = sbr.rel (0) target = $region29
    $region28: #{_lambda_.1} parent=1 // pred_region
      _
    $region29: #{_lambda_.1} parent=1 // pred_fallthru
      _
    // Predicated region
    $region30: #{_lambda_.1} parent=1 // pred_check
      _
    $region31: #{_lambda_.1} parent=1 // pred_check_branch
      %407 = sbr.rel (0) target = $region33
    $region32: #{_lambda_.1} parent=1 // pred_region
      %409 = dma.done [#allocation4], 32
    $region33: #{_lambda_.1} parent=1 // pred_fallthru
      _
    %410 = vsyncpa [#allocation3], 1
    %411 = vsyncpa [#allocation4], 1

</llo_original>
